<compile_context>
chip_gen: v7x
topology: tpu7x:2x2x1
jax: 0.10.0
libtpu: 0.0.40
codegen_flags: <defaults>
</compile_context>

<pallas_src>
import functools

import jax
import jax.numpy as jnp
from jax.experimental import pallas as pl
from jax.experimental.pallas import tpu as pltpu


def _round_up(x: int, m: int) -> int:
    return ((x + m - 1) // m) * m


# ----------------------------- fused Pallas kernel ------------------------- #

def _fused_mlp_kernel(x_ref, *refs):
    """Entire MLP (all hidden Linear+ReLU layers + output head) in one kernel.

    refs = (w0, b0, w1, b1, ..., w_head, b_head, out_ref)
      x   : (TB, D0)           f32  (batch tile, logical input width)
      w_i : (Din_i, Dout_i^p)  bf16 (Dout padded to a multiple of 128)
      b_i : (1, Dout_i^p)      f32  (full-array block -> exempt from the (8,128)
                                     rule; keep it full-array in any refactor)
      out : (TB, Dlast^p)      f32
    ReLU after every layer except the output head.  MXU gets bf16 inputs with
    f32 accumulation; intermediate activations never leave vregs/VMEM.
    """
    out_ref = refs[-1]
    params = refs[:-1]
    n_layers = len(params) // 2

    h = x_ref[...].astype(jnp.bfloat16)              # feed the MXU bf16
    for i in range(n_layers):
        w = params[2 * i][...]                       # bf16 weights
        b = params[2 * i + 1][...]                   # f32 bias, broadcast once
        acc = jnp.dot(h, w, preferred_element_type=jnp.float32) + b
        if i < n_layers - 1:
            h = jnp.maximum(acc, 0.0).astype(jnp.bfloat16)   # ReLU on the VPU
        else:
            out_ref[...] = acc.astype(out_ref.dtype)


# ----------------------------- forward wrapper ----------------------------- #

def _fused_mlp_forward(x, flat_params, *, out_dim_logical):
    B, d_in = x.shape
    out_pad = flat_params[-1].shape[-1]              # last bias: (1, Dout_pad)

    # Batch tiling: a "parallel" batch grid lets v7x's 2 TensorCores both work.
    # For small B we use a single full-array block (exempt from (8,128)), so x
    # needs no host-side padding at all.
    tb = B
    for cand in (512, 256, 128, 64, 32, 16, 8):
        if B % cand == 0 and B // cand >= 2:
            tb = cand
            break
    grid = (B // tb,)

    in_specs = [pl.BlockSpec((tb, d_in), lambda i: (i, 0))]
    for p in flat_params:
        # Weights/biases: full-array blocks with constant index_map -> fetched
        # once and resident across the batch grid (not re-DMA'd per step).
        in_specs.append(pl.BlockSpec(p.shape, lambda i: (0, 0)))
    out_spec = pl.BlockSpec((tb, out_pad), lambda i: (i, 0))

    # VMEM budget: params (x2 for Pallas buffering) + double-buffered x/out
    # tiles + slack, capped at 64 MiB (v7x physical per-TC ceiling).
    # TODO(synk): once summed weights approach tens of MiB, tile each layer over
    # its output-feature axis instead of keeping every weight fully resident.
    param_bytes = sum(int(p.size) * p.dtype.itemsize for p in flat_params)
    io_bytes = 2 * (tb * d_in + tb * out_pad) * 4
    vmem_bytes = int(min(64 << 20,
                         max(32 << 20, 2 * param_bytes + io_bytes + (4 << 20))))

    out_padded = pl.pallas_call(
        _fused_mlp_kernel,
        out_shape=jax.ShapeDtypeStruct((B, out_pad), x.dtype),
        grid=grid,
        in_specs=in_specs,
        out_specs=out_spec,
        compiler_params=pltpu.CompilerParams(
            dimension_semantics=("parallel",),
            vmem_limit_bytes=vmem_bytes),
    )(x, *flat_params)

    return out_padded[:, :out_dim_logical]


def _mlp_apply(x, flat_params, log_std, *, out_dim_logical, output_type):
    """Single jitted entry point: pallas_call + slice + (optional) std glue."""
    out = _fused_mlp_forward(x, flat_params, out_dim_logical=out_dim_logical)
    if output_type == "continuous":
        std = jnp.exp(jnp.clip(log_std, -20.0, 2.0))
        return out, std
    return out


# ------------------------------- MLP module -------------------------------- #

class PallasMLP:
    """JAX/Pallas port of the PyTorch MLP (ReLU activation)."""

    def __init__(self, input_dim, hidden_dims, output_dim,
                 output_type="discrete", *, key):
        self.output_type = output_type.lower()
        assert self.output_type in ("discrete", "continuous", "value")

        dims = [input_dim] + list(hidden_dims)
        self.backbone = []  # logical (W, b) in f32, W:(Din, Dout)
        for i in range(len(hidden_dims)):
            key, kw, kb = jax.random.split(key, 3)
            bound = 1.0 / float(dims[i]) ** 0.5     # mimic nn.Linear default init
            w = jax.random.uniform(kw, (dims[i], dims[i + 1]),
                                   jnp.float32, -bound, bound)
            b = jax.random.uniform(kb, (dims[i + 1],),
                                   jnp.float32, -bound, bound)
            self.backbone.append((w, b))

        prev_dim = dims[-1]
        head_out = 1 if self.output_type == "value" else output_dim
        key, kw, kb = jax.random.split(key, 3)
        bound = 1.0 / float(prev_dim) ** 0.5
        self.head_w = jax.random.uniform(kw, (prev_dim, head_out),
                                         jnp.float32, -bound, bound)
        self.head_b = jax.random.uniform(kb, (head_out,),
                                         jnp.float32, -bound, bound)
        self.log_std = (jnp.zeros((output_dim,), jnp.float32)
                        if self.output_type == "continuous" else None)

        self._head_out = head_out
        self._flat_params = self._build_padded_params()
        # Single jitted forward: one XLA dispatch, one pallas_call inside.
        self._forward = jax.jit(functools.partial(
            _mlp_apply, out_dim_logical=head_out, output_type=self.output_type))

    def _build_padded_params(self):
        """Pad each weight's Dout to a multiple of 128 (lane-dense), keep the
        first layer's Din logical; cast weights to bf16 (biases stay f32).
        Zero padding keeps the logical math exact."""
        flat = []
        all_layers = list(self.backbone) + [(self.head_w, self.head_b)]
        prev_pad = None
        for idx, (w, b) in enumerate(all_layers):
            din, dout = w.shape
            din_p = din if idx == 0 else prev_pad   # chain to previous padded width
            dout_p = _round_up(dout, 128)
            w_p = jnp.zeros((din_p, dout_p), jnp.float32).at[:din, :dout].set(w)
            b_p = jnp.zeros((1, dout_p), jnp.float32).at[0, :dout].set(b)
            flat.append(w_p.astype(jnp.bfloat16))
            flat.append(b_p)
            prev_pad = dout_p
        return tuple(flat)

    def __call__(self, x):
        return self._forward(x, self._flat_params, self.log_std)


# ------------------------------ reference ---------------------------------- #

def _ref_forward(model, x):
    """Pure-JAX reference (bf16 MXU inputs, f32 accumulation — matches kernel)."""
    h = x
    for w, b in model.backbone:
        h = jnp.dot(h.astype(jnp.bfloat16), w.astype(jnp.bfloat16),
                    preferred_element_type=jnp.float32) + b
        h = jnp.maximum(h, 0.0)
    out = jnp.dot(h.astype(jnp.bfloat16), model.head_w.astype(jnp.bfloat16),
                  preferred_element_type=jnp.float32) + model.head_b
    if model.output_type == "continuous":
        return out, jnp.exp(jnp.clip(model.log_std, -20.0, 2.0))
    return out


if __name__ == "__main__":
    key = jax.random.PRNGKey(0)
    key, k_in, k_in2, k_m1, k_m2, k_m3 = jax.random.split(key, 6)

    batch, input_dim, hidden_dims, output_dim = 2, 16, [32, 32], 8
    x = jax.random.normal(k_in, (batch, input_dim), jnp.float32)

    TOL = dict(atol=2e-2, rtol=2e-2)  # bf16 MXU inputs, f32 accumulation

    # --- discrete policy head --------------------------------------------- #
    model_d = PallasMLP(input_dim, hidden_dims, output_dim,
                        output_type="discrete", key=k_m1)
    logits = jax.block_until_ready(model_d(x))
    ref_d = _ref_forward(model_d, x)
    assert logits.shape == (batch, output_dim)
    assert jnp.allclose(logits, ref_d, **TOL)

    # --- value head --------------------------------------------------------- #
    model_v = PallasMLP(input_dim, hidden_dims, output_dim,
                        output_type="value", key=k_m2)
    value = jax.block_until_ready(model_v(x))
    ref_v = _ref_forward(model_v, x)
    assert value.shape == (batch, 1)
    assert jnp.allclose(value, ref_v, **TOL)

    # --- continuous policy head --------------------------------------------- #
    model_c = PallasMLP(input_dim, hidden_dims, output_dim,
                        output_type="continuous", key=k_m3)
    mu, std = model_c(x)
    mu = jax.block_until_ready(mu)
    ref_mu, ref_std = _ref_forward(model_c, x)
    assert mu.shape == (batch, output_dim)
    assert jnp.allclose(mu, ref_mu, **TOL)
    assert jnp.allclose(std, ref_std, atol=1e-6, rtol=1e-6)

    # --- larger batch: exercises the parallel batch grid path --------------- #
    xb = jax.random.normal(k_in2, (16, input_dim), jnp.float32)
    logits_b = jax.block_until_ready(model_d(xb))
    ref_b = _ref_forward(model_d, xb)
    assert logits_b.shape == (16, output_dim)
    assert jnp.allclose(logits_b, ref_b, **TOL)

    print("KERNEL_OK")
</pallas_src>

<mosaic_0001>
module attributes {stable_mosaic.version = 11 : i64} {
  func.func @_fused_mlp_kernel(%arg0: i32, %arg1: memref<2x16xf32, #tpu.memory_space<vmem>>, %arg2: memref<16x128xbf16, #tpu.memory_space<vmem>>, %arg3: memref<1x128xf32, #tpu.memory_space<vmem>>, %arg4: memref<128x128xbf16, #tpu.memory_space<vmem>>, %arg5: memref<1x128xf32, #tpu.memory_space<vmem>>, %arg6: memref<128x128xbf16, #tpu.memory_space<vmem>>, %arg7: memref<1x128xf32, #tpu.memory_space<vmem>>, %arg8: memref<2x128xf32, #tpu.memory_space<vmem>>) attributes {dimension_semantics = [#tpu.dimension_semantics<parallel>], iteration_bounds = array<i64: 1>, scalar_prefetch = 0 : i64, scratch_operands = 0 : i64, tpu.core_type = #tpu.core_type<tc>, window_params = [{transform_indices = @transform_0, window_bounds = array<i64: 2, 16>}, {pipeline_mode = #tpu.pipeline_mode<synchronous>, transform_indices = @transform_1, window_bounds = array<i64: 16, 128>}, {pipeline_mode = #tpu.pipeline_mode<synchronous>, transform_indices = @transform_2, window_bounds = array<i64: 1, 128>}, {pipeline_mode = #tpu.pipeline_mode<synchronous>, transform_indices = @transform_3, window_bounds = array<i64: 128, 128>}, {pipeline_mode = #tpu.pipeline_mode<synchronous>, transform_indices = @transform_4, window_bounds = array<i64: 1, 128>}, {pipeline_mode = #tpu.pipeline_mode<synchronous>, transform_indices = @transform_5, window_bounds = array<i64: 128, 128>}, {pipeline_mode = #tpu.pipeline_mode<synchronous>, transform_indices = @transform_6, window_bounds = array<i64: 1, 128>}, {transform_indices = @transform_7, window_bounds = array<i64: 2, 128>}]} {
    %c0 = arith.constant 0 : index
    %c0_0 = arith.constant 0 : index
    %0 = vector.load %arg1[%c0, %c0_0] : memref<2x16xf32, #tpu.memory_space<vmem>>, vector<2x16xf32>
    %1 = arith.truncf %0 : vector<2x16xf32> to vector<2x16xbf16>
    %c0_1 = arith.constant 0 : index
    %c0_2 = arith.constant 0 : index
    %2 = vector.load %arg2[%c0_1, %c0_2] : memref<16x128xbf16, #tpu.memory_space<vmem>>, vector<16x128xbf16>
    %c0_3 = arith.constant 0 : index
    %c0_4 = arith.constant 0 : index
    %3 = vector.load %arg3[%c0_3, %c0_4] : memref<1x128xf32, #tpu.memory_space<vmem>>, vector<1x128xf32>
    %cst = arith.constant dense<0.000000e+00> : vector<2x128xf32>
    %4 = tpu.matmul %1, %2, %cst {dimension_numbers = #tpu.dot_dimension_numbers<[1], [0], [0], [1], [0, 0, 1, 1], [], []>} : vector<2x16xbf16>, vector<16x128xbf16>, vector<2x128xf32> -> vector<2x128xf32>
    %5 = vector.broadcast %3 : vector<1x128xf32> to vector<2x128xf32>
    %6 = arith.addf %4, %5 : vector<2x128xf32>
    %cst_5 = arith.constant 0.000000e+00 : f32
    %7 = vector.broadcast %cst_5 : f32 to vector<2x128xf32>
    %8 = arith.maximumf %6, %7 : vector<2x128xf32>
    %9 = arith.truncf %8 : vector<2x128xf32> to vector<2x128xbf16>
    %c0_6 = arith.constant 0 : index
    %c0_7 = arith.constant 0 : index
    %10 = vector.load %arg4[%c0_6, %c0_7] : memref<128x128xbf16, #tpu.memory_space<vmem>>, vector<128x128xbf16>
    %c0_8 = arith.constant 0 : index
    %c0_9 = arith.constant 0 : index
    %11 = vector.load %arg5[%c0_8, %c0_9] : memref<1x128xf32, #tpu.memory_space<vmem>>, vector<1x128xf32>
    %cst_10 = arith.constant dense<0.000000e+00> : vector<2x128xf32>
    %12 = tpu.matmul %9, %10, %cst_10 {dimension_numbers = #tpu.dot_dimension_numbers<[1], [0], [0], [1], [0, 0, 1, 1], [], []>} : vector<2x128xbf16>, vector<128x128xbf16>, vector<2x128xf32> -> vector<2x128xf32>
    %13 = vector.broadcast %11 : vector<1x128xf32> to vector<2x128xf32>
    %14 = arith.addf %12, %13 : vector<2x128xf32>
    %cst_11 = arith.constant 0.000000e+00 : f32
    %15 = vector.broadcast %cst_11 : f32 to vector<2x128xf32>
    %16 = arith.maximumf %14, %15 : vector<2x128xf32>
    %17 = arith.truncf %16 : vector<2x128xf32> to vector<2x128xbf16>
    %c0_12 = arith.constant 0 : index
    %c0_13 = arith.constant 0 : index
    %18 = vector.load %arg6[%c0_12, %c0_13] : memref<128x128xbf16, #tpu.memory_space<vmem>>, vector<128x128xbf16>
    %c0_14 = arith.constant 0 : index
    %c0_15 = arith.constant 0 : index
    %19 = vector.load %arg7[%c0_14, %c0_15] : memref<1x128xf32, #tpu.memory_space<vmem>>, vector<1x128xf32>
    %cst_16 = arith.constant dense<0.000000e+00> : vector<2x128xf32>
    %20 = tpu.matmul %17, %18, %cst_16 {dimension_numbers = #tpu.dot_dimension_numbers<[1], [0], [0], [1], [0, 0, 1, 1], [], []>} : vector<2x128xbf16>, vector<128x128xbf16>, vector<2x128xf32> -> vector<2x128xf32>
    %21 = vector.broadcast %19 : vector<1x128xf32> to vector<2x128xf32>
    %22 = arith.addf %20, %21 : vector<2x128xf32>
    %c0_17 = arith.constant 0 : index
    %c0_18 = arith.constant 0 : index
    %23 = vector.load %arg8[%c0_17, %c0_18] : memref<2x128xf32, #tpu.memory_space<vmem>>, vector<2x128xf32>
    tpu.vector_store %arg8[%c0_17, %c0_18], %22 {strides = array<i32>} : memref<2x128xf32, #tpu.memory_space<vmem>>, vector<2x128xf32>,
    return
  }
  func.func @transform_0(%arg0: i32) -> (i32, i32) {
    %c0_i32 = arith.constant 0 : i32
    %c0_i32_0 = arith.constant 0 : i32
    return %arg0, %c0_i32 : i32, i32
  }
  func.func @transform_1(%arg0: i32) -> (i32, i32) {
    %c0_i32 = arith.constant 0 : i32
    %c0_i32_0 = arith.constant 0 : i32
    %c0_i32_1 = arith.constant 0 : i32
    return %c0_i32, %c0_i32_0 : i32, i32
  }
  func.func @transform_2(%arg0: i32) -> (i32, i32) {
    %c0_i32 = arith.constant 0 : i32
    %c0_i32_0 = arith.constant 0 : i32
    %c0_i32_1 = arith.constant 0 : i32
    return %c0_i32, %c0_i32_0 : i32, i32
  }
  func.func @transform_3(%arg0: i32) -> (i32, i32) {
    %c0_i32 = arith.constant 0 : i32
    %c0_i32_0 = arith.constant 0 : i32
    %c0_i32_1 = arith.constant 0 : i32
    return %c0_i32, %c0_i32_0 : i32, i32
  }
  func.func @transform_4(%arg0: i32) -> (i32, i32) {
    %c0_i32 = arith.constant 0 : i32
    %c0_i32_0 = arith.constant 0 : i32
    %c0_i32_1 = arith.constant 0 : i32
    return %c0_i32, %c0_i32_0 : i32, i32
  }
  func.func @transform_5(%arg0: i32) -> (i32, i32) {
    %c0_i32 = arith.constant 0 : i32
    %c0_i32_0 = arith.constant 0 : i32
    %c0_i32_1 = arith.constant 0 : i32
    return %c0_i32, %c0_i32_0 : i32, i32
  }
  func.func @transform_6(%arg0: i32) -> (i32, i32) {
    %c0_i32 = arith.constant 0 : i32
    %c0_i32_0 = arith.constant 0 : i32
    %c0_i32_1 = arith.constant 0 : i32
    return %c0_i32, %c0_i32_0 : i32, i32
  }
  func.func @transform_7(%arg0: i32) -> (i32, i32) {
    %c0_i32 = arith.constant 0 : i32
    %c0_i32_0 = arith.constant 0 : i32
    return %arg0, %c0_i32 : i32, i32
  }
}

</mosaic_0001>

<llo_original>
// kernel: _mlp_apply.1
$region0: #{_mlp_apply.1}
  #allocation0 [shape = 'u32[]', space=smem, size = 0x4, offset = 0x4, fixed_abs, tag = 'smem constant byte address 0x4 - core index']
  #allocation1 [shape = 'u32[144,128]{1,0:T(1,128)}', space=vmem, size = 0x12000, scoped, tag = 'internal scratch']
  %s0 = inlined_call_operand.hbm [shape: f32[2,16], index: 0, kind: input, shape index: {}]
  %s1 = inlined_call_operand.hbm [shape: bf16[16,128], index: 1, kind: input, shape index: {}]
  %s2 = inlined_call_operand.vmem [shape: f32[1,128], index: 2, kind: input, shape index: {}]
  %s3 = inlined_call_operand.hbm [shape: bf16[128,128], index: 3, kind: input, shape index: {}]
  %s4 = inlined_call_operand.vmem [shape: f32[1,128], index: 4, kind: input, shape index: {}]
  %s5 = inlined_call_operand.hbm [shape: bf16[128,128], index: 5, kind: input, shape index: {}]
  %s6 = inlined_call_operand.vmem [shape: f32[1,128], index: 6, kind: input, shape index: {}]
  %s7 = inlined_call_operand.hbm [shape: f32[2,128], index: 7, kind: output, shape index: {}]
  %s8 = sld [smem:[#allocation0]]
  $region54: #{_mlp_apply.1} parent=0
    _
  %s10 = ssub.s32 1, %s8
  %s11 = scalar_select 0, %s10, %s8
  $region1: #{_mlp_apply.1} parent=0
    #allocation2 [shape = 'u8[1024]{0}', space=vmem, size = 0x400, scoped, tag = 'input window, operand 0, single buffered']
    #allocation3 [shape = 's32[1]{0}', space=sflag, size = 0x4, scoped, tag = 'scoped memory for _mlp_apply.1']
    #allocation4 [shape = 's32[1]{0}', space=sflag, size = 0x4, scoped, tag = 'scoped memory for _mlp_apply.1']
    #allocation5 [shape = 'u8[4096]{0}', space=vmem, size = 0x1000, scoped, tag = 'input window, operand 1, single buffered']
    #allocation6 [shape = 's32[1]{0}', space=sflag, size = 0x4, scoped, tag = 'scoped memory for _mlp_apply.1']
    #allocation7 [shape = 'u8[32768]{0}', space=vmem, size = 0x8000, scoped, tag = 'input window, operand 3, single buffered']
    #allocation8 [shape = 'u8[32768]{0}', space=vmem, size = 0x8000, scoped, tag = 'input window, operand 5, single buffered']
    #allocation9 [shape = 's32[1]{0}', space=sflag, size = 0x4, scoped, tag = 'scoped memory for _mlp_apply.1']
    #allocation10 [shape = 'u8[1024]{0}', space=vmem, size = 0x400, scoped, tag = 'output window, operand 0, single buffered']
    %12 = vsyncpa [#allocation3], 0
    %13 = vsyncpa [#allocation6], 0
    %14 = vsyncpa [#allocation9], 0
    %15 = vsyncpa [#allocation4], 0
    // Predicated region
    $region2: #{_mlp_apply.1} parent=1 // pred_check
      _
    $region3: #{_mlp_apply.1} parent=1 // pred_check_branch
      %17 = sbr.rel (0) target = $region5
    $region4: #{_mlp_apply.1} parent=1 // pred_region
      %s19 = ssub.s32 32, 32
      %20 = vsyncadd [#allocation3], %s19
      %s22 = sshll.u32 [#allocation2], 4
      %s23 = int_to_ptr.vmem [resolvable:$true] %s22
      %25 = dma.hbm_to_vmem [thread:$0]  %s0, 32, %s23, [#allocation3]
    $region5: #{_mlp_apply.1} parent=1 // pred_fallthru
      _
    // Predicated region
    $region6: #{_mlp_apply.1} parent=1 // pred_check
      _
    $region7: #{_mlp_apply.1} parent=1 // pred_check_branch
      %27 = sbr.rel (0) target = $region9
    $region8: #{_mlp_apply.1} parent=1 // pred_region
      %s29 = ssub.s32 128, 128
      %30 = vsyncadd [#allocation6], %s29
      %s31 = sshll.u32 [#allocation5], 4
      %s32 = int_to_ptr.vmem [resolvable:$true] %s31
      %37 = dma.hbm_to_vmem [thread:$0]  %s1, 128, %s32, [#allocation6], 64, 64, 4
    $region9: #{_mlp_apply.1} parent=1 // pred_fallthru
      _
    // Predicated region
    $region10: #{_mlp_apply.1} parent=1 // pred_check
      _
    $region11: #{_mlp_apply.1} parent=1 // pred_check_branch
      %39 = sbr.rel (0) target = $region13
    $region12: #{_mlp_apply.1} parent=1 // pred_region
      _
    $region13: #{_mlp_apply.1} parent=1 // pred_fallthru
      _
    // Predicated region
    $region14: #{_mlp_apply.1} parent=1 // pred_check
      _
    $region15: #{_mlp_apply.1} parent=1 // pred_check_branch
      %41 = sbr.rel (0) target = $region17
    $region16: #{_mlp_apply.1} parent=1 // pred_region
      %s43 = ssub.s32 1024, 1024
      %44 = vsyncadd [#allocation6], %s43
      %s45 = sshll.u32 [#allocation7], 4
      %s46 = int_to_ptr.vmem [resolvable:$true] %s45
      %51 = dma.hbm_to_vmem [thread:$0]  %s3, 1024, %s46, [#allocation6], 64, 64, 4
    $region17: #{_mlp_apply.1} parent=1 // pred_fallthru
      _
    // Predicated region
    $region18: #{_mlp_apply.1} parent=1 // pred_check
      _
    $region19: #{_mlp_apply.1} parent=1 // pred_check_branch
      %53 = sbr.rel (0) target = $region21
    $region20: #{_mlp_apply.1} parent=1 // pred_region
      _
    $region21: #{_mlp_apply.1} parent=1 // pred_fallthru
      _
    // Predicated region
    $region22: #{_mlp_apply.1} parent=1 // pred_check
      _
    $region23: #{_mlp_apply.1} parent=1 // pred_check_branch
      %55 = sbr.rel (0) target = $region25
    $region24: #{_mlp_apply.1} parent=1 // pred_region
      %s57 = ssub.s32 1024, 1024
      %58 = vsyncadd [#allocation9], %s57
      %s59 = sshll.u32 [#allocation8], 4
      %s60 = int_to_ptr.vmem [resolvable:$true] %s59
      %65 = dma.hbm_to_vmem [thread:$0]  %s5, 1024, %s60, [#allocation9], 64, 64, 4
    $region25: #{_mlp_apply.1} parent=1 // pred_fallthru
      _
    // Predicated region
    $region26: #{_mlp_apply.1} parent=1 // pred_check
      _
    $region27: #{_mlp_apply.1} parent=1 // pred_check_branch
      %67 = sbr.rel (0) target = $region29
    $region28: #{_mlp_apply.1} parent=1 // pred_region
      _
    $region29: #{_mlp_apply.1} parent=1 // pred_fallthru
      _
    // Predicated region
    $region30: #{_mlp_apply.1} parent=1 // pred_check
      _
    $region31: #{_mlp_apply.1} parent=1 // pred_check_branch
      %69 = sbr.rel (0) target = $region33
    $region32: #{_mlp_apply.1} parent=1 // pred_region
      %70 = dma.done [#allocation3], 32
    $region33: #{_mlp_apply.1} parent=1 // pred_fallthru
      _
    // Predicated region
    $region34: #{_mlp_apply.1} parent=1 // pred_check
      _
    $region35: #{_mlp_apply.1} parent=1 // pred_check_branch
      %72 = sbr.rel (0) target = $region37
    $region36: #{_mlp_apply.1} parent=1 // pred_region
      %73 = dma.done [#allocation6], 128
    $region37: #{_mlp_apply.1} parent=1 // pred_fallthru
      _
    // Predicated region
    $region38: #{_mlp_apply.1} parent=1 // pred_check
      _
    $region39: #{_mlp_apply.1} parent=1 // pred_check_branch
      %75 = sbr.rel (0) target = $region41
    $region40: #{_mlp_apply.1} parent=1 // pred_region
      %76 = dma.done [#allocation6], 1024
    $region41: #{_mlp_apply.1} parent=1 // pred_fallthru
      _
    // Predicated region
    $region42: #{_mlp_apply.1} parent=1 // pred_check
      _
    $region43: #{_mlp_apply.1} parent=1 // pred_check_branch
      %78 = sbr.rel (0) target = $region45
    $region44: #{_mlp_apply.1} parent=1 // pred_region
      %79 = dma.done [#allocation9], 1024
    $region45: #{_mlp_apply.1} parent=1 // pred_fallthru
      _
    %v81 = vld [vmem:[#allocation2] sm:$0x3]
    %v82 = vpack.c.bf16 %v81, %v81
    %v83 = vld [vmem:[#allocation5] sm:$0xf]
    %v84 = vld [vmem:[#allocation5 + $0x4] sm:$0xf]
    %v85 = vld [vmem:[%s2] sm:$0x1]
    %v87 = vlaneseq
    %v88 = vshrl.u32 %v87, 7
    %v89 = vsub.s32 0, %v88
    %v90 = vrot.slane %v85, %v89
    %v94 = vunpack.c.l.b16 %v83
    %v95 = vunpack.c.l.b16 %v84
    %v96 = vpack.c.b16 %v95, %v94
    %vm98 = vcmask 130048
    %v100 = vsel %vm98, %v82, 0
    %102 = vmatprep.subr.bf16.mxu0 0
    %103 = vmatpush1.bf16.msra.mxu0 %v96
    %104 = vmatprep.subr.bf16.mxu0 0
    %105 = vmatpush1.bf16.msra.mxu0 0
    %106 = vmatprep.subr.bf16.mxu0 0
    %107 = vmatpush1.bf16.msra.mxu0 0
    %108 = vmatprep.subr.bf16.mxu0 0
    %109 = vmatpush1.bf16.msra.mxu0 0
    %110 = vmatprep.subr.bf16.mxu0 0
    %111 = vmatpush1.bf16.msra.mxu0 0
    %112 = vmatprep.subr.bf16.mxu0 0
    %113 = vmatpush1.bf16.msra.mxu0 0
    %114 = vmatprep.subr.bf16.mxu0 0
    %115 = vmatpush1.bf16.msra.mxu0 0
    %116 = vmatprep.subr.bf16.mxu0 0
    %117 = vmatpush1.bf16.msra.mxu0 0
    %118 = vmatprep.subr.bf16.mxu0 0
    %119 = vmatpush1.bf16.msra.mxu0 0
    %120 = vmatprep.subr.bf16.mxu0 0
    %121 = vmatpush1.bf16.msra.mxu0 0
    %122 = vmatprep.subr.bf16.mxu0 0
    %123 = vmatpush1.bf16.msra.mxu0 0
    %124 = vmatprep.subr.bf16.mxu0 0
    %125 = vmatpush1.bf16.msra.mxu0 0
    %126 = vmatprep.subr.bf16.mxu0 0
    %127 = vmatpush1.bf16.msra.mxu0 0
    %128 = vmatprep.subr.bf16.mxu0 0
    %129 = vmatpush1.bf16.msra.mxu0 0
    %130 = vmatprep.subr.bf16.mxu0 0
    %131 = vmatpush1.bf16.msra.mxu0 0
    %132 = vmatprep.subr.bf16.mxu0 0
    %133 = vmatpush1.bf16.msra.mxu0 0
    %134 = vmatprep.mubr.bf16.mxu0 0
    %135 = vmatmul.mubr.bf16.gmra.mrb[0].mxu0 %v100
    %v136 = vpop.f32.mrb[0].mxu0
    %v137 = vadd.f32 %v90, %v136
    %v138 = vpop.f32.mrb[0].mxu0
    %v139 = vpop.f32.mrb[0].mxu0
    %v140 = vpop.f32.mrb[0].mxu0
    %141 = vdwg.mxu0
    %v142 = vmax.f32 %v137, 0.0
    %v143 = vpack.c.bf16 %v142, %v142
    %v144 = vld [vmem:[#allocation7] sm:$0xf]
    %v145 = vld [vmem:[#allocation7 + $0x4] sm:$0xf]
    %v146 = vld [vmem:[#allocation7 + $0x8] sm:$0xf]
    %v147 = vld [vmem:[#allocation7 + $0xc] sm:$0xf]
    %v148 = vld [vmem:[#allocation7 + $0x10] sm:$0xf]
    %v149 = vld [vmem:[#allocation7 + $0x14] sm:$0xf]
    %v150 = vld [vmem:[#allocation7 + $0x18] sm:$0xf]
    %v151 = vld [vmem:[#allocation7 + $0x1c] sm:$0xf]
    %v152 = vld [vmem:[#allocation7 + $0x20] sm:$0xf]
    %v153 = vld [vmem:[#allocation7 + $0x24] sm:$0xf]
    %v154 = vld [vmem:[#allocation7 + $0x28] sm:$0xf]
    %v155 = vld [vmem:[#allocation7 + $0x2c] sm:$0xf]
    %v156 = vld [vmem:[#allocation7 + $0x30] sm:$0xf]
    %v157 = vld [vmem:[#allocation7 + $0x34] sm:$0xf]
    %v158 = vld [vmem:[#allocation7 + $0x38] sm:$0xf]
    %v159 = vld [vmem:[#allocation7 + $0x3c] sm:$0xf]
    %v160 = vld [vmem:[%s4] sm:$0x1]
    %v162 = vlaneseq
    %v163 = vshrl.u32 %v162, 7
    %v164 = vsub.s32 0, %v163
    %v165 = vrot.slane %v160, %v164
    %v183 = vunpack.c.l.b16 %v144
    %v184 = vunpack.c.l.b16 %v145
    %v185 = vunpack.c.l.b16 %v146
    %v186 = vunpack.c.l.b16 %v147
    %v187 = vunpack.c.l.b16 %v148
    %v188 = vunpack.c.l.b16 %v149
    %v189 = vunpack.c.l.b16 %v150
    %v190 = vunpack.c.l.b16 %v151
    %v191 = vunpack.c.l.b16 %v152
    %v192 = vunpack.c.l.b16 %v153
    %v193 = vunpack.c.l.b16 %v154
    %v194 = vunpack.c.l.b16 %v155
    %v195 = vunpack.c.l.b16 %v156
    %v196 = vunpack.c.l.b16 %v157
    %v197 = vunpack.c.l.b16 %v158
    %v198 = vunpack.c.l.b16 %v159
    %v199 = vpack.c.b16 %v184, %v183
    %v200 = vpack.c.b16 %v186, %v185
    %v201 = vpack.c.b16 %v188, %v187
    %v202 = vpack.c.b16 %v190, %v189
    %v203 = vpack.c.b16 %v192, %v191
    %v204 = vpack.c.b16 %v194, %v193
    %v205 = vpack.c.b16 %v196, %v195
    %v206 = vpack.c.b16 %v198, %v197
    %215 = vmatprep.subr.bf16.mxu0 0
    %216 = vmatpush1.bf16.msra.mxu0 %v199
    %217 = vmatprep.subr.bf16.mxu0 0
    %218 = vmatpush1.bf16.msra.mxu0 %v200
    %219 = vmatprep.subr.bf16.mxu0 0
    %220 = vmatpush1.bf16.msra.mxu0 %v201
    %221 = vmatprep.subr.bf16.mxu0 0
    %222 = vmatpush1.bf16.msra.mxu0 %v202
    %223 = vmatprep.subr.bf16.mxu0 0
    %224 = vmatpush1.bf16.msra.mxu0 %v203
    %225 = vmatprep.subr.bf16.mxu0 0
    %226 = vmatpush1.bf16.msra.mxu0 %v204
    %227 = vmatprep.subr.bf16.mxu0 0
    %228 = vmatpush1.bf16.msra.mxu0 %v205
    %229 = vmatprep.subr.bf16.mxu0 0
    %230 = vmatpush1.bf16.msra.mxu0 %v206
    %231 = vmatprep.subr.bf16.mxu0 0
    %232 = vmatpush1.bf16.msra.mxu0 0
    %233 = vmatprep.subr.bf16.mxu0 0
    %234 = vmatpush1.bf16.msra.mxu0 0
    %235 = vmatprep.subr.bf16.mxu0 0
    %236 = vmatpush1.bf16.msra.mxu0 0
    %237 = vmatprep.subr.bf16.mxu0 0
    %238 = vmatpush1.bf16.msra.mxu0 0
    %239 = vmatprep.subr.bf16.mxu0 0
    %240 = vmatpush1.bf16.msra.mxu0 0
    %241 = vmatprep.subr.bf16.mxu0 0
    %242 = vmatpush1.bf16.msra.mxu0 0
    %243 = vmatprep.subr.bf16.mxu0 0
    %244 = vmatpush1.bf16.msra.mxu0 0
    %245 = vmatprep.subr.bf16.mxu0 0
    %246 = vmatpush1.bf16.msra.mxu0 0
    %247 = vmatprep.mubr.bf16.mxu0 0
    %248 = vmatmul.mubr.bf16.gmra.mrb[0].mxu0 %v143
    %v249 = vpop.f32.mrb[0].mxu0
    %v250 = vadd.f32 %v165, %v249
    %v251 = vpop.f32.mrb[0].mxu0
    %v252 = vpop.f32.mrb[0].mxu0
    %v253 = vpop.f32.mrb[0].mxu0
    %254 = vdwg.mxu0
    %v255 = vmax.f32 %v250, 0.0
    %v256 = vpack.c.bf16 %v255, %v255
    %v257 = vld [vmem:[#allocation8] sm:$0xf]
    %v258 = vld [vmem:[#allocation8 + $0x4] sm:$0xf]
    %v259 = vld [vmem:[#allocation8 + $0x8] sm:$0xf]
    %v260 = vld [vmem:[#allocation8 + $0xc] sm:$0xf]
    %v261 = vld [vmem:[#allocation8 + $0x10] sm:$0xf]
    %v262 = vld [vmem:[#allocation8 + $0x14] sm:$0xf]
    %v263 = vld [vmem:[#allocation8 + $0x18] sm:$0xf]
    %v264 = vld [vmem:[#allocation8 + $0x1c] sm:$0xf]
    %v265 = vld [vmem:[#allocation8 + $0x20] sm:$0xf]
    %v266 = vld [vmem:[#allocation8 + $0x24] sm:$0xf]
    %v267 = vld [vmem:[#allocation8 + $0x28] sm:$0xf]
    %v268 = vld [vmem:[#allocation8 + $0x2c] sm:$0xf]
    %v269 = vld [vmem:[#allocation8 + $0x30] sm:$0xf]
    %v270 = vld [vmem:[#allocation8 + $0x34] sm:$0xf]
    %v271 = vld [vmem:[#allocation8 + $0x38] sm:$0xf]
    %v272 = vld [vmem:[#allocation8 + $0x3c] sm:$0xf]
    %v273 = vld [vmem:[%s6] sm:$0x1]
    %v275 = vlaneseq
    %v276 = vshrl.u32 %v275, 7
    %v277 = vsub.s32 0, %v276
    %v278 = vrot.slane %v273, %v277
    %v296 = vunpack.c.l.b16 %v257
    %v297 = vunpack.c.l.b16 %v258
    %v298 = vunpack.c.l.b16 %v259
    %v299 = vunpack.c.l.b16 %v260
    %v300 = vunpack.c.l.b16 %v261
    %v301 = vunpack.c.l.b16 %v262
    %v302 = vunpack.c.l.b16 %v263
    %v303 = vunpack.c.l.b16 %v264
    %v304 = vunpack.c.l.b16 %v265
    %v305 = vunpack.c.l.b16 %v266
    %v306 = vunpack.c.l.b16 %v267
    %v307 = vunpack.c.l.b16 %v268
    %v308 = vunpack.c.l.b16 %v269
    %v309 = vunpack.c.l.b16 %v270
    %v310 = vunpack.c.l.b16 %v271
    %v311 = vunpack.c.l.b16 %v272
    %v312 = vpack.c.b16 %v297, %v296
    %v313 = vpack.c.b16 %v299, %v298
    %v314 = vpack.c.b16 %v301, %v300
    %v315 = vpack.c.b16 %v303, %v302
    %v316 = vpack.c.b16 %v305, %v304
    %v317 = vpack.c.b16 %v307, %v306
    %v318 = vpack.c.b16 %v309, %v308
    %v319 = vpack.c.b16 %v311, %v310
    %328 = vmatprep.subr.bf16.mxu0 0
    %329 = vmatpush1.bf16.msra.mxu0 %v312
    %330 = vmatprep.subr.bf16.mxu0 0
    %331 = vmatpush1.bf16.msra.mxu0 %v313
    %332 = vmatprep.subr.bf16.mxu0 0
    %333 = vmatpush1.bf16.msra.mxu0 %v314
    %334 = vmatprep.subr.bf16.mxu0 0
    %335 = vmatpush1.bf16.msra.mxu0 %v315
    %336 = vmatprep.subr.bf16.mxu0 0
    %337 = vmatpush1.bf16.msra.mxu0 %v316
    %338 = vmatprep.subr.bf16.mxu0 0
    %339 = vmatpush1.bf16.msra.mxu0 %v317
    %340 = vmatprep.subr.bf16.mxu0 0
    %341 = vmatpush1.bf16.msra.mxu0 %v318
    %342 = vmatprep.subr.bf16.mxu0 0
    %343 = vmatpush1.bf16.msra.mxu0 %v319
    %344 = vmatprep.subr.bf16.mxu0 0
    %345 = vmatpush1.bf16.msra.mxu0 0
    %346 = vmatprep.subr.bf16.mxu0 0
    %347 = vmatpush1.bf16.msra.mxu0 0
    %348 = vmatprep.subr.bf16.mxu0 0
    %349 = vmatpush1.bf16.msra.mxu0 0
    %350 = vmatprep.subr.bf16.mxu0 0
    %351 = vmatpush1.bf16.msra.mxu0 0
    %352 = vmatprep.subr.bf16.mxu0 0
    %353 = vmatpush1.bf16.msra.mxu0 0
    %354 = vmatprep.subr.bf16.mxu0 0
    %355 = vmatpush1.bf16.msra.mxu0 0
    %356 = vmatprep.subr.bf16.mxu0 0
    %357 = vmatpush1.bf16.msra.mxu0 0
    %358 = vmatprep.subr.bf16.mxu0 0
    %359 = vmatpush1.bf16.msra.mxu0 0
    %360 = vmatprep.mubr.bf16.mxu0 0
    %361 = vmatmul.mubr.bf16.gmra.mrb[0].mxu0 %v256
    %v362 = vpop.f32.mrb[0].mxu0
    %v363 = vadd.f32 %v278, %v362
    %v364 = vpop.f32.mrb[0].mxu0
    %v365 = vpop.f32.mrb[0].mxu0
    %v366 = vpop.f32.mrb[0].mxu0
    %367 = vdwg.mxu0
    %368 = vst [vmem:[#allocation10] sm:$0x3] %v363
    // Predicated region
    $region46: #{_mlp_apply.1} parent=1 // pred_check
      _
    $region47: #{_mlp_apply.1} parent=1 // pred_check_branch
      %370 = sbr.rel (0) target = $region49
    $region48: #{_mlp_apply.1} parent=1 // pred_region
      %s372 = ssub.s32 32, 32
      %373 = vsyncadd [#allocation4], %s372
      %s375 = sshll.u32 [#allocation10], 4
      %s376 = int_to_ptr.vmem [resolvable:$true] %s375
      %378 = dma.vmem_to_hbm [thread:$0]  %s376, 32, %s7, [#allocation4]
    $region49: #{_mlp_apply.1} parent=1 // pred_fallthru
      _
    // Predicated region
    $region50: #{_mlp_apply.1} parent=1 // pred_check
      _
    $region51: #{_mlp_apply.1} parent=1 // pred_check_branch
      %380 = sbr.rel (0) target = $region53
    $region52: #{_mlp_apply.1} parent=1 // pred_region
      %381 = dma.done [#allocation4], 32
    $region53: #{_mlp_apply.1} parent=1 // pred_fallthru
      _
    %382 = vsyncpa [#allocation3], 1
    %383 = vsyncpa [#allocation6], 1
    %384 = vsyncpa [#allocation9], 1
    %385 = vsyncpa [#allocation4], 1

</llo_original>
